<compile_context>
chip_gen: v7x
topology: tpu7x:2x2x1
jax: 0.10.0
libtpu: 0.0.40
codegen_flags: <defaults>
</compile_context>

<pallas_src>
import functools
import math

import jax
import jax.numpy as jnp
from jax.experimental import pallas as pl
from jax.experimental.pallas import tpu as pltpu


_LANE = 128
_MAX_BLOCK_BYTES = 4 * 1024 * 1024   # per-buffer output-block budget (f32)
_MAX_SEL_BYTES = 2 * 1024 * 1024     # cap on the bf16 selection matrix
_VMEM_LIMIT = 32 * 1024 * 1024       # safe on v5e/v6e (128 MiB) and v7x (64 MiB)


def _pick_tile(total_rows, max_rows):
    """Row tile: multiple of 8 (or the full dim), within budget, >=2 grid steps if possible."""
    if total_rows <= 8:
        return total_rows                       # full dim is always a legal block dim
    half = -(-total_rows // 2)
    half = -(-half // 8) * 8                    # round up to a multiple of 8
    tile = min(max_rows, half)
    return max(8, (tile // 8) * 8)


def _pick_fold(n, c):
    """Largest g (multiple of 128/gcd(c,128), 8 <= g <= 128) with n % g == 0, or None."""
    if c % _LANE == 0:
        return None                             # row-wise path is already lane-dense
    if c > 256:
        return None                             # selection matrix would outgrow its budget
    base = _LANE // math.gcd(c, _LANE)          # smallest g making g*c a multiple of 128
    best = None
    g = base
    while g <= _LANE:
        if g >= 8 and n % g == 0 and 2 * g * g * c <= _MAX_SEL_BYTES:
            best = g
        g += base
    return best


# ---------------------------------------------------------------------------
# Folded layout: pack g rows into one g*C-lane output row (g*C % 128 == 0).
# Output array (n/g, g*C) is a free row-major view of (n, C).
# ---------------------------------------------------------------------------
def _one_hot_fold_kernel(x_ref, sel_ref, pat_ref, o_ref):
    # x_ref: (ti, g) int32 indices (lane-dense), sel_ref: (g, g*C) bf16 0/1,
    # pat_ref: (1, g*C) f32 with pat[j] = j % C, o_ref: (ti, g*C) f32.
    # MXU does the lane spread: spread[i, j] = x[i, j // C]  (exact: one-hot columns).
    spread = jnp.dot(x_ref[...].astype(jnp.bfloat16), sel_ref[...],
                     preferred_element_type=jnp.float32)
    o_ref[...] = (spread == pat_ref[...]).astype(jnp.float32)


def _one_hot_folded(x_flat, c, g):
    n = x_flat.shape[0]
    rows = n // g                               # exact: _pick_fold guarantees n % g == 0
    width = g * c                               # multiple of 128 -> lane-dense stores
    x2 = x_flat.reshape(rows, g)

    j = jnp.arange(width, dtype=jnp.int32)
    sel = (jnp.arange(g, dtype=jnp.int32)[:, None] == (j // c)[None, :]).astype(jnp.bfloat16)
    pat = (j % c).astype(jnp.float32)[None, :]

    ti = _pick_tile(rows, max(8, (_MAX_BLOCK_BYTES // (width * 4)) // 8 * 8))
    grid = (pl.cdiv(rows, ti),)

    out = pl.pallas_call(
        _one_hot_fold_kernel,
        out_shape=jax.ShapeDtypeStruct((rows, width), jnp.float32),
        grid_spec=pltpu.PrefetchScalarGridSpec(
            num_scalar_prefetch=0,
            grid=grid,
            in_specs=[
                pl.BlockSpec((ti, g), lambda i: (i, 0)),
                pl.BlockSpec((g, width), lambda i: (0, 0)),   # constant block: fetched once
                pl.BlockSpec((1, width), lambda i: (0, 0)),   # constant block: fetched once
            ],
            out_specs=pl.BlockSpec((ti, width), lambda i: (i, 0)),
        ),
        compiler_params=pltpu.CompilerParams(
            dimension_semantics=("parallel",),
            vmem_limit_bytes=_VMEM_LIMIT,
        ),
        cost_estimate=pl.CostEstimate(
            flops=2 * n * c * g + n * c,
            transcendentals=0,
            bytes_accessed=4 * n * c + 4 * n + 2 * g * width + 4 * width,
        ),
    )(x2, sel, pat)

    return out.reshape(n, c)                    # row-major view of the packed layout


# ---------------------------------------------------------------------------
# Row-wise layout: C a multiple of 128 (lane-dense class tiles) or general fallback.
# ---------------------------------------------------------------------------
def _one_hot_row_kernel(x_ref, o_ref, *, tc):
    # x_ref: (tm, 1) int32, o_ref: (tm, tc) f32 — class tile at program_id(1).
    cls = pl.program_id(1) * tc + jax.lax.broadcasted_iota(jnp.int32, (1, tc), 1)
    o_ref[...] = (x_ref[...] == cls).astype(jnp.float32)


def _largest_class_tile(c, cap=2048):
    # Largest multiple-of-128 divisor of c that is <= cap (128 always divides c here).
    best = _LANE
    t = _LANE
    while t <= min(c, cap):
        if c % t == 0:
            best = t
        t += _LANE
    return best


def _one_hot_rowwise(x_flat, c):
    n = x_flat.shape[0]
    tc = _largest_class_tile(c) if c % _LANE == 0 else c
    tm = _pick_tile(n, max(8, (_MAX_BLOCK_BYTES // (tc * 4)) // 8 * 8))
    # TODO(synk): the (tm, 1) index block is still lane-sparse; here input traffic is
    # <= 1/tc of the output so it is tolerated — fixing it needs an in-kernel
    # lanes->sublanes relayout.
    x2 = x_flat.reshape(n, 1)
    grid = (pl.cdiv(n, tm), c // tc)

    out = pl.pallas_call(
        functools.partial(_one_hot_row_kernel, tc=tc),
        out_shape=jax.ShapeDtypeStruct((n, c), jnp.float32),
        grid_spec=pltpu.PrefetchScalarGridSpec(
            num_scalar_prefetch=0,
            grid=grid,
            in_specs=[pl.BlockSpec((tm, 1), lambda i, j: (i, 0))],
            out_specs=pl.BlockSpec((tm, tc), lambda i, j: (i, j)),
        ),
        compiler_params=pltpu.CompilerParams(
            dimension_semantics=("parallel", "parallel"),
            vmem_limit_bytes=_VMEM_LIMIT,
        ),
        cost_estimate=pl.CostEstimate(
            flops=n * c, transcendentals=0, bytes_accessed=4 * n * c + 4 * n),
    )(x2)
    return out


def one_hot(x, num_classes):
    """x: integer array of any shape. Returns float32 (*x.shape, num_classes)."""
    c = int(num_classes)
    orig_shape = tuple(x.shape)
    x_flat = x.reshape(-1).astype(jnp.int32)
    n = int(x_flat.shape[0])
    if n == 0:
        return jnp.zeros((*orig_shape, c), jnp.float32)
    g = _pick_fold(n, c)
    if g is not None:
        out = _one_hot_folded(x_flat, c, g)
    else:
        out = _one_hot_rowwise(x_flat, c)
    return out.reshape(*orig_shape, c)


if __name__ == "__main__":
    key = jax.random.PRNGKey(0)

    # Primary test — matches the PyTorch module: (batch, seq) integer tokens, C=32.
    batch, seq, num_classes = 2, 8, 32
    x = jax.random.randint(key, (batch, seq), 0, num_classes, dtype=jnp.int32)
    y = jax.block_until_ready(one_hot(x, num_classes))
    ref = jax.nn.one_hot(x, num_classes, dtype=jnp.float32)
    assert y.shape == (batch, seq, num_classes)
    assert y.dtype == jnp.float32
    assert bool(jnp.all(y == ref))

    # Folded path with lane-dense input (n % 128 == 0), ragged final row block, >=2 steps.
    x2 = jax.random.randint(jax.random.PRNGKey(1), (4, 320), 0, 32, dtype=jnp.int32)
    y2 = jax.block_until_ready(one_hot(x2, 32))
    assert bool(jnp.all(y2 == jax.nn.one_hot(x2, 32, dtype=jnp.float32)))

    # Row-wise lane-dense path (num_classes a multiple of 128), ragged row blocks.
    x3 = jax.random.randint(jax.random.PRNGKey(2), (3, 9), 0, 256, dtype=jnp.int32)
    y3 = jax.block_until_ready(one_hot(x3, 256))
    assert bool(jnp.all(y3 == jax.nn.one_hot(x3, 256, dtype=jnp.float32)))

    # Row-wise fallback (small C that cannot fold for this n).
    x4 = jax.random.randint(jax.random.PRNGKey(3), (3, 5), 0, 10, dtype=jnp.int32)
    y4 = jax.block_until_ready(one_hot(x4, 10))
    assert bool(jnp.all(y4 == jax.nn.one_hot(x4, 10, dtype=jnp.float32)))

    print("KERNEL_OK")
</pallas_src>

<mosaic_0001>
module attributes {stable_mosaic.version = 11 : i64} {
  func.func @_one_hot_fold_kernel(%arg0: i32, %arg1: memref<1x16xi32, #tpu.memory_space<vmem>>, %arg2: memref<16x512xbf16, #tpu.memory_space<vmem>>, %arg3: memref<1x512xf32, #tpu.memory_space<vmem>>, %arg4: memref<1x512xf32, #tpu.memory_space<vmem>>) attributes {dimension_semantics = [#tpu.dimension_semantics<parallel>], iteration_bounds = array<i64: 1>, scalar_prefetch = 0 : i64, scratch_operands = 0 : i64, tpu.core_type = #tpu.core_type<tc>, window_params = [{transform_indices = @transform_0, window_bounds = array<i64: 1, 16>}, {pipeline_mode = #tpu.pipeline_mode<synchronous>, transform_indices = @transform_1, window_bounds = array<i64: 16, 512>}, {pipeline_mode = #tpu.pipeline_mode<synchronous>, transform_indices = @transform_2, window_bounds = array<i64: 1, 512>}, {transform_indices = @transform_3, window_bounds = array<i64: 1, 512>}]} {
    %c0 = arith.constant 0 : index
    %c0_0 = arith.constant 0 : index
    %0 = vector.load %arg1[%c0, %c0_0] : memref<1x16xi32, #tpu.memory_space<vmem>>, vector<1x16xi32>
    %1 = arith.sitofp %0 : vector<1x16xi32> to vector<1x16xbf16>
    %c0_1 = arith.constant 0 : index
    %c0_2 = arith.constant 0 : index
    %2 = vector.load %arg2[%c0_1, %c0_2] : memref<16x512xbf16, #tpu.memory_space<vmem>>, vector<16x512xbf16>
    %cst = arith.constant dense<0.000000e+00> : vector<1x512xf32>
    %3 = tpu.matmul %1, %2, %cst {dimension_numbers = #tpu.dot_dimension_numbers<[1], [0], [0], [1], [0, 0, 1, 1], [], []>} : vector<1x16xbf16>, vector<16x512xbf16>, vector<1x512xf32> -> vector<1x512xf32>
    %c0_3 = arith.constant 0 : index
    %c0_4 = arith.constant 0 : index
    %4 = vector.load %arg3[%c0_3, %c0_4] : memref<1x512xf32, #tpu.memory_space<vmem>>, vector<1x512xf32>
    %5 = arith.cmpf oeq, %3, %4 : vector<1x512xf32>
    %6 = arith.extui %5 : vector<1x512xi1> to vector<1x512xi32>
    %7 = arith.sitofp %6 : vector<1x512xi32> to vector<1x512xf32>
    %c0_5 = arith.constant 0 : index
    %c0_6 = arith.constant 0 : index
    %8 = vector.load %arg4[%c0_5, %c0_6] : memref<1x512xf32, #tpu.memory_space<vmem>>, vector<1x512xf32>
    tpu.vector_store %arg4[%c0_5, %c0_6], %7 {strides = array<i32>} : memref<1x512xf32, #tpu.memory_space<vmem>>, vector<1x512xf32>,
    return
  }
  func.func @transform_0(%arg0: i32) -> (i32, i32) {
    %c0_i32 = arith.constant 0 : i32
    %c0_i32_0 = arith.constant 0 : i32
    return %arg0, %c0_i32 : i32, i32
  }
  func.func @transform_1(%arg0: i32) -> (i32, i32) {
    %c0_i32 = arith.constant 0 : i32
    %c0_i32_0 = arith.constant 0 : i32
    %c0_i32_1 = arith.constant 0 : i32
    return %c0_i32, %c0_i32_0 : i32, i32
  }
  func.func @transform_2(%arg0: i32) -> (i32, i32) {
    %c0_i32 = arith.constant 0 : i32
    %c0_i32_0 = arith.constant 0 : i32
    %c0_i32_1 = arith.constant 0 : i32
    return %c0_i32, %c0_i32_0 : i32, i32
  }
  func.func @transform_3(%arg0: i32) -> (i32, i32) {
    %c0_i32 = arith.constant 0 : i32
    %c0_i32_0 = arith.constant 0 : i32
    return %arg0, %c0_i32 : i32, i32
  }
}

</mosaic_0001>

<llo_original>
// kernel: tpu_custom_call.1
$region0: #{tpu_custom_call.1}
  #allocation0 [shape = 'u32[]', space=smem, size = 0x4, offset = 0x4, fixed_abs, tag = 'smem constant byte address 0x4 - core index']
  #allocation1 [shape = 'u32[144,128]{1,0:T(1,128)}', space=vmem, size = 0x12000, scoped, tag = 'internal scratch']
  %s0 = inlined_call_operand.hbm [shape: s32[1,16], index: 0, kind: input, shape index: {}]
  %s1 = inlined_call_operand.hbm [shape: bf16[16,512], index: 1, kind: input, shape index: {}]
  %s2 = inlined_call_operand.vmem [shape: f32[1,512], index: 2, kind: input, shape index: {}]
  %s3 = inlined_call_operand.hbm [shape: f32[1,512], index: 3, kind: output, shape index: {}]
  %s4 = sld [smem:[#allocation0]]
  $region30: #{tpu_custom_call.1} parent=0
    _
  %s6 = ssub.s32 1, %s4
  %s7 = scalar_select 0, %s6, %s4
  $region1: #{tpu_custom_call.1} parent=0
    #allocation2 [shape = 'u8[512]{0}', space=vmem, size = 0x400, scoped, tag = 'input window, operand 0, single buffered']
    #allocation3 [shape = 's32[1]{0}', space=sflag, size = 0x4, scoped, tag = 'scoped memory for tpu_custom_call.1']
    #allocation4 [shape = 's32[1]{0}', space=sflag, size = 0x4, scoped, tag = 'scoped memory for tpu_custom_call.1']
    #allocation5 [shape = 'u8[16384]{0}', space=vmem, size = 0x4000, scoped, tag = 'input window, operand 1, single buffered']
    #allocation6 [shape = 's32[1]{0}', space=sflag, size = 0x4, scoped, tag = 'scoped memory for tpu_custom_call.1']
    #allocation7 [shape = 'u8[2048]{0}', space=vmem, size = 0x800, scoped, tag = 'output window, operand 0, single buffered']
    %8 = vsyncpa [#allocation3], 0
    %9 = vsyncpa [#allocation6], 0
    %10 = vsyncpa [#allocation4], 0
    // Predicated region
    $region2: #{tpu_custom_call.1} parent=1 // pred_check
      _
    $region3: #{tpu_custom_call.1} parent=1 // pred_check_branch
      %12 = sbr.rel (0) target = $region5
    $region4: #{tpu_custom_call.1} parent=1 // pred_region
      %s14 = ssub.s32 16, 16
      %15 = vsyncadd [#allocation3], %s14
      %s17 = sshll.u32 [#allocation2], 4
      %s18 = int_to_ptr.vmem [resolvable:$true] %s17
      %20 = dma.hbm_to_vmem [thread:$0]  %s0, 16, %s18, [#allocation3]
    $region5: #{tpu_custom_call.1} parent=1 // pred_fallthru
      _
    // Predicated region
    $region6: #{tpu_custom_call.1} parent=1 // pred_check
      _
    $region7: #{tpu_custom_call.1} parent=1 // pred_check_branch
      %22 = sbr.rel (0) target = $region9
    $region8: #{tpu_custom_call.1} parent=1 // pred_region
      %s24 = ssub.s32 512, 512
      %25 = vsyncadd [#allocation6], %s24
      %s26 = sshll.u32 [#allocation5], 4
      %s27 = int_to_ptr.vmem [resolvable:$true] %s26
      %32 = dma.hbm_to_vmem [thread:$0]  %s1, 512, %s27, [#allocation6], 256, 256, 16
    $region9: #{tpu_custom_call.1} parent=1 // pred_fallthru
      _
    // Predicated region
    $region10: #{tpu_custom_call.1} parent=1 // pred_check
      _
    $region11: #{tpu_custom_call.1} parent=1 // pred_check_branch
      %34 = sbr.rel (0) target = $region13
    $region12: #{tpu_custom_call.1} parent=1 // pred_region
      _
    $region13: #{tpu_custom_call.1} parent=1 // pred_fallthru
      _
    // Predicated region
    $region14: #{tpu_custom_call.1} parent=1 // pred_check
      _
    $region15: #{tpu_custom_call.1} parent=1 // pred_check_branch
      %36 = sbr.rel (0) target = $region17
    $region16: #{tpu_custom_call.1} parent=1 // pred_region
      %37 = dma.done [#allocation3], 16
    $region17: #{tpu_custom_call.1} parent=1 // pred_fallthru
      _
    // Predicated region
    $region18: #{tpu_custom_call.1} parent=1 // pred_check
      _
    $region19: #{tpu_custom_call.1} parent=1 // pred_check_branch
      %39 = sbr.rel (0) target = $region21
    $region20: #{tpu_custom_call.1} parent=1 // pred_region
      %40 = dma.done [#allocation6], 512
    $region21: #{tpu_custom_call.1} parent=1 // pred_fallthru
      _
    %v42 = vld [vmem:[#allocation2] sm:$0x1]
    %v43 = vcvt.s32.f32 %v42
    %v44 = vpack.c.bf16 %v43, %v43
    %v45 = vld [vmem:[#allocation5] sm:$0xff]
    %v46 = vld [vmem:[#allocation5 + $0x8] sm:$0xff]
    %v47 = vld [vmem:[#allocation5 + $0x10] sm:$0xff]
    %v48 = vld [vmem:[#allocation5 + $0x18] sm:$0xff]
    %v53 = vunpack.c.l.b16 %v45
    %v54 = vunpack.c.h.b16 %v45
    %v55 = vunpack.c.l.b16 %v46
    %v56 = vunpack.c.h.b16 %v46
    %v57 = vunpack.c.l.b16 %v47
    %v58 = vunpack.c.h.b16 %v47
    %v59 = vunpack.c.l.b16 %v48
    %v60 = vunpack.c.h.b16 %v48
    %v61 = vpack.c.b16 %v57, %v53
    %v62 = vpack.c.b16 %v58, %v54
    %v63 = vpack.c.b16 %v59, %v55
    %v64 = vpack.c.b16 %v60, %v56
    %vm69 = vcmask 130048
    %v71 = vsel %vm69, %v44, 0
    %73 = vmatprep.subr.bf16.mxu0 %v62
    %74 = vmatpush1.bf16.msra.mxu0 %v61
    %75 = vmatprep.subr.bf16.mxu0 0
    %76 = vmatpush1.bf16.msra.mxu0 0
    %77 = vmatprep.subr.bf16.mxu0 0
    %78 = vmatpush1.bf16.msra.mxu0 0
    %79 = vmatprep.subr.bf16.mxu0 0
    %80 = vmatpush1.bf16.msra.mxu0 0
    %81 = vmatprep.subr.bf16.mxu0 0
    %82 = vmatpush1.bf16.msra.mxu0 0
    %83 = vmatprep.subr.bf16.mxu0 0
    %84 = vmatpush1.bf16.msra.mxu0 0
    %85 = vmatprep.subr.bf16.mxu0 0
    %86 = vmatpush1.bf16.msra.mxu0 0
    %87 = vmatprep.subr.bf16.mxu0 0
    %88 = vmatpush1.bf16.msra.mxu0 0
    %89 = vmatprep.subr.bf16.mxu0 0
    %90 = vmatpush1.bf16.msra.mxu0 0
    %91 = vmatprep.subr.bf16.mxu0 0
    %92 = vmatpush1.bf16.msra.mxu0 0
    %93 = vmatprep.subr.bf16.mxu0 0
    %94 = vmatpush1.bf16.msra.mxu0 0
    %95 = vmatprep.subr.bf16.mxu0 0
    %96 = vmatpush1.bf16.msra.mxu0 0
    %97 = vmatprep.subr.bf16.mxu0 0
    %98 = vmatpush1.bf16.msra.mxu0 0
    %99 = vmatprep.subr.bf16.mxu0 0
    %100 = vmatpush1.bf16.msra.mxu0 0
    %101 = vmatprep.subr.bf16.mxu0 0
    %102 = vmatpush1.bf16.msra.mxu0 0
    %103 = vmatprep.subr.bf16.mxu0 0
    %104 = vmatpush1.bf16.msra.mxu0 0
    %105 = vmatprep.mubr.bf16.mxu0 0
    %106 = vmatmul.mubr.bf16.gmra.mrb[0].mxu0 %v71
    %v107 = vpop.f32.mrb[0].mxu0
    %v108 = vadd.f32 0.0, %v107
    %v109 = vpop.f32.mrb[0].mxu0
    %v110 = vadd.f32 0.0, %v109
    %v111 = vpop.f32.mrb[0].mxu0
    %v112 = vpop.f32.mrb[0].mxu0
    %113 = vdwg.mxu0
    %114 = vmatprep.subr.bf16.mxu0 %v64
    %115 = vmatpush1.bf16.msra.mxu0 %v63
    %116 = vmatprep.subr.bf16.mxu0 0
    %117 = vmatpush1.bf16.msra.mxu0 0
    %118 = vmatprep.subr.bf16.mxu0 0
    %119 = vmatpush1.bf16.msra.mxu0 0
    %120 = vmatprep.subr.bf16.mxu0 0
    %121 = vmatpush1.bf16.msra.mxu0 0
    %122 = vmatprep.subr.bf16.mxu0 0
    %123 = vmatpush1.bf16.msra.mxu0 0
    %124 = vmatprep.subr.bf16.mxu0 0
    %125 = vmatpush1.bf16.msra.mxu0 0
    %126 = vmatprep.subr.bf16.mxu0 0
    %127 = vmatpush1.bf16.msra.mxu0 0
    %128 = vmatprep.subr.bf16.mxu0 0
    %129 = vmatpush1.bf16.msra.mxu0 0
    %130 = vmatprep.subr.bf16.mxu0 0
    %131 = vmatpush1.bf16.msra.mxu0 0
    %132 = vmatprep.subr.bf16.mxu0 0
    %133 = vmatpush1.bf16.msra.mxu0 0
    %134 = vmatprep.subr.bf16.mxu0 0
    %135 = vmatpush1.bf16.msra.mxu0 0
    %136 = vmatprep.subr.bf16.mxu0 0
    %137 = vmatpush1.bf16.msra.mxu0 0
    %138 = vmatprep.subr.bf16.mxu0 0
    %139 = vmatpush1.bf16.msra.mxu0 0
    %140 = vmatprep.subr.bf16.mxu0 0
    %141 = vmatpush1.bf16.msra.mxu0 0
    %142 = vmatprep.subr.bf16.mxu0 0
    %143 = vmatpush1.bf16.msra.mxu0 0
    %144 = vmatprep.subr.bf16.mxu0 0
    %145 = vmatpush1.bf16.msra.mxu0 0
    %146 = vmatprep.mubr.bf16.mxu0 0
    %147 = vmatmul.mubr.bf16.gmra.mrb[0].mxu0 %v71
    %v148 = vpop.f32.mrb[0].mxu0
    %v149 = vadd.f32 0.0, %v148
    %v150 = vpop.f32.mrb[0].mxu0
    %v151 = vadd.f32 0.0, %v150
    %v152 = vpop.f32.mrb[0].mxu0
    %v153 = vpop.f32.mrb[0].mxu0
    %154 = vdwg.mxu0
    %v155 = vld [vmem:[%s2] sm:$0xf]
    %v157 = vlaneseq
    %v158 = vshrl.u32 %v157, 7
    %v159 = vsub.s32 0, %v158
    %v160 = vrot.slane %v155, %v159
    %v161 = vlaneseq
    %v162 = vshrl.u32 %v161, 7
    %v163 = vsub.s32 1, %v162
    %v164 = vrot.slane %v155, %v163
    %v165 = vlaneseq
    %v166 = vshrl.u32 %v165, 7
    %v167 = vsub.s32 2, %v166
    %v168 = vrot.slane %v155, %v167
    %v169 = vlaneseq
    %v170 = vshrl.u32 %v169, 7
    %v171 = vsub.s32 3, %v170
    %v172 = vrot.slane %v155, %v171
    %vm177 = vcmp.eq.f32.partialorder %v108, %v160
    %vm178 = vcmp.eq.f32.partialorder %v110, %v164
    %vm179 = vcmp.eq.f32.partialorder %v149, %v168
    %vm180 = vcmp.eq.f32.partialorder %v151, %v172
    %v181 = vsel %vm177, 1, 0
    %v182 = vsel %vm178, 1, 0
    %v183 = vsel %vm179, 1, 0
    %v184 = vsel %vm180, 1, 0
    %v185 = vcvt.s32.f32 %v181
    %v186 = vcvt.s32.f32 %v182
    %v187 = vcvt.s32.f32 %v183
    %v188 = vcvt.s32.f32 %v184
    %v193 = vcombine.low %v185, %v186
    %v194 = vcombine.low %v187, %v188
    %v196 = vunpack.c.l.s4 1966171168
    %v197 = vunpack.c.0.s8 %v196
    %v198 = vlaneseq
    %v199 = vshrl.u32 %v198, 7
    %v200 = vsub.s32 %v197, %v199
    %v201 = vrot.slane %v193, %v200
    %v203 = vunpack.c.l.s4 1966171168
    %v204 = vunpack.c.0.s8 %v203
    %v205 = vlaneseq
    %v206 = vshrl.u32 %v205, 7
    %v207 = vsub.s32 %v204, %v206
    %v208 = vrot.slane %v194, %v207
    %v209 = vcombine.low %v201, %v208
    %v211 = vunpack.c.l.s4 1966171168
    %v212 = vunpack.c.0.s8 %v211
    %v213 = vlaneseq
    %v214 = vshrl.u32 %v213, 7
    %v215 = vsub.s32 %v212, %v214
    %v216 = vrot.slane %v209, %v215
    %v218 = vlaneseq
    %vm219 = vcmp.ge.s32.totalorder %v218, 0
    %vm220 = vcmp.lt.s32.totalorder %v218, 512
    %vm221 = vmand %vm219, %vm220
    %222 = vst.msk [vmem:[#allocation7] sm:$0xf] %vm221, %v216
    // Predicated region
    $region22: #{tpu_custom_call.1} parent=1 // pred_check
      _
    $region23: #{tpu_custom_call.1} parent=1 // pred_check_branch
      %224 = sbr.rel (0) target = $region25
    $region24: #{tpu_custom_call.1} parent=1 // pred_region
      %s226 = ssub.s32 64, 64
      %227 = vsyncadd [#allocation4], %s226
      %s229 = sshll.u32 [#allocation7], 4
      %s230 = int_to_ptr.vmem [resolvable:$true] %s229
      %232 = dma.vmem_to_hbm [thread:$0]  %s230, 64, %s3, [#allocation4]
    $region25: #{tpu_custom_call.1} parent=1 // pred_fallthru
      _
    // Predicated region
    $region26: #{tpu_custom_call.1} parent=1 // pred_check
      _
    $region27: #{tpu_custom_call.1} parent=1 // pred_check_branch
      %234 = sbr.rel (0) target = $region29
    $region28: #{tpu_custom_call.1} parent=1 // pred_region
      %235 = dma.done [#allocation4], 64
    $region29: #{tpu_custom_call.1} parent=1 // pred_fallthru
      _
    %236 = vsyncpa [#allocation3], 1
    %237 = vsyncpa [#allocation6], 1
    %238 = vsyncpa [#allocation4], 1

</llo_original>
